<compile_context>
chip_gen: v7x
topology: tpu7x:2x2x1
jax: 0.10.0
libtpu: 0.0.40
codegen_flags: <defaults>
</compile_context>

<pallas_src>
import math
import functools

import jax
import jax.numpy as jnp
from jax.experimental import pallas as pl
from jax.experimental.pallas import tpu as pltpu


DEFAULT_TM = 512     # M tile (multiple of 8)
DEFAULT_TN = 2048    # N tile (multiple of 128); safe on v7x only with bf16 operands (we use bf16)
DEFAULT_TK = 1024    # K tile (multiple of 128)
MAX_FULL_K = 2048    # contract the whole K axis in one tile when K <= this


def _round_up(x: int, m: int) -> int:
    return ((x + m - 1) // m) * m


def _vmem_capacity_bytes() -> int:
    try:
        return int(pltpu.get_tpu_info().vmem_capacity_bytes)
    except Exception:
        return 64 * 1024 * 1024  # conservative (v7x-sized) fallback


def _select_kn_tiles(K: int, N: int, tk: int = DEFAULT_TK, tn: int = DEFAULT_TN):
    """Tile sizes along K (contraction) and N (output lanes).

    Used identically by prepare_linear_params and linear_pallas so the one-time
    weight padding matches the kernel's BlockSpecs.
    """
    if K <= MAX_FULL_K:
        tk = _round_up(K, 128)                 # single K step per output block
    else:
        tk = min(tk, _round_up(K, 128))
    tn = min(tn, _round_up(N, 128))
    return tk, tn


def prepare_linear_params(weight, bias, *, compute_dtype=jnp.bfloat16,
                          tn: int = DEFAULT_TN, tk: int = DEFAULT_TK):
    """One-time parameter prep (NOT per forward pass).

    * transpose stored PyTorch [vocab, d_model] weight to NN layout (K, N),
    * zero-pad to tile boundaries once,
    * cast the matmul operand to bf16 (MXU-native, halves HBM bytes).
    Bias stays f32 (added into the f32 accumulator).
    """
    N, K = weight.shape
    tk, tn = _select_kn_tiles(K, N, tk=tk, tn=tn)
    Kp, Np = _round_up(K, tk), _round_up(N, tn)
    w_kn = jnp.pad(weight, ((0, Np - N), (0, Kp - K))).T.astype(compute_dtype)  # (Kp, Np)
    b_row = jnp.pad(bias.reshape(1, N), ((0, 0), (0, Np - N))).astype(jnp.float32)  # (1, Np)
    return w_kn, b_row


def _linear_kernel(x_ref, w_ref, b_ref, o_ref):
    # x_ref: (tm, tk) bf16   w_ref: (tk, tn) bf16   b_ref: (1, tn) f32   o_ref: (tm, tn) f32
    k = pl.program_id(2)

    # o_ref's block index is constant across the K axis, so the f32 output block stays
    # resident in VMEM for the whole reduction: accumulate directly into it (no scratch)
    # and fold the bias add into the k == 0 init.
    @pl.when(k == 0)
    def _init():
        o_ref[...] = jnp.broadcast_to(b_ref[...], o_ref.shape)

    o_ref[...] += jnp.dot(x_ref[...], w_ref[...], preferred_element_type=jnp.float32)


@functools.partial(jax.jit,
                   static_argnames=("vocab_size", "tm", "tn", "tk", "compute_dtype"))
def linear_pallas(x, w_kn, b_row, *, vocab_size: int, tm: int = DEFAULT_TM,
                  tn: int = DEFAULT_TN, tk: int = DEFAULT_TK,
                  compute_dtype=jnp.bfloat16):
    """y = x @ weight.T + bias, with (w_kn, b_row) from prepare_linear_params."""
    K = x.shape[-1]
    Kp, Np = w_kn.shape
    lead_shape = x.shape[:-1]

    x2d = x.reshape(-1, K)
    M = x2d.shape[0]

    # Clamp tm so decode-like (small-M) shapes stream the weight exactly once.
    tm = min(tm, _round_up(M, 8))
    tk, tn = _select_kn_tiles(K, vocab_size, tk=tk, tn=tn)
    assert Kp % tk == 0 and Np % tn == 0, "tile sizes must match prepare_linear_params"

    Mp = _round_up(M, tm)
    # Only the (small) activation is padded per call; the weight was padded once.
    x_p = jnp.pad(x2d.astype(compute_dtype), ((0, Mp - M), (0, Kp - K)))

    grid = (Mp // tm, Np // tn, Kp // tk)

    in_bytes = jnp.dtype(compute_dtype).itemsize
    # Double-buffered footprint: x + w tiles (bf16) + output block + bias (f32).
    vmem_needed = 2 * (tm * tk + tk * tn) * in_bytes + 2 * (tm * tn + tn) * 4
    vmem_cap = _vmem_capacity_bytes()
    # Raise the scoped-VMEM limit past the 16/32 MiB defaults, staying below physical
    # capacity (64 MiB on v7x, 128 MiB on v5e/v6e).
    vmem_limit = max(min(int(0.85 * vmem_cap), 100 * 1024 * 1024), vmem_needed)

    flops = 2 * Mp * Kp * Np
    bytes_accessed = (x_p.size + w_kn.size) * in_bytes + b_row.size * 4 + Mp * Np * 4

    out = pl.pallas_call(
        _linear_kernel,
        out_shape=jax.ShapeDtypeStruct((Mp, Np), jnp.float32),
        grid=grid,
        in_specs=[
            pl.BlockSpec((tm, tk), lambda i, j, k: (i, k)),   # activation tile
            pl.BlockSpec((tk, tn), lambda i, j, k: (k, j)),   # weight tile, NN layout
            pl.BlockSpec((1, tn), lambda i, j, k: (0, j)),    # bias row
        ],
        out_specs=pl.BlockSpec((tm, tn), lambda i, j, k: (i, j)),
        compiler_params=pltpu.CompilerParams(
            dimension_semantics=("parallel", "parallel", "arbitrary"),
            vmem_limit_bytes=vmem_limit,
        ),
        cost_estimate=pl.CostEstimate(
            flops=flops, transcendentals=0, bytes_accessed=bytes_accessed),
    )(x_p, w_kn, b_row)

    return out[:M, :vocab_size].reshape(*lead_shape, vocab_size)


if __name__ == "__main__":
    # Small shapes consistent with the module: batch=2, seq=8, d_model=32, vocab=64
    batch, seq, d_model, vocab_size = 2, 8, 32, 64

    key = jax.random.PRNGKey(0)
    kx, kw, kb = jax.random.split(key, 3)

    # nn.Linear-style init: U[-1/sqrt(in), 1/sqrt(in)]
    bound = 1.0 / math.sqrt(d_model)
    weight = jax.random.uniform(kw, (vocab_size, d_model), jnp.float32, -bound, bound)
    bias = jax.random.uniform(kb, (vocab_size,), jnp.float32, -bound, bound)
    x = jax.random.normal(kx, (batch, seq, d_model), jnp.float32)

    # One-time parameter prep (transpose to (K, N), pad, bf16 cast), then the kernel.
    w_kn, b_row = prepare_linear_params(weight, bias)
    y = linear_pallas(x, w_kn, b_row, vocab_size=vocab_size)
    jax.block_until_ready(y)

    assert y.shape == (batch, seq, vocab_size)

    # Loose check vs the pure-f32 reference (bf16 MXU operands => relaxed tolerance).
    y_ref_f32 = x @ weight.T + bias
    assert jnp.allclose(y, y_ref_f32, atol=5e-2, rtol=5e-2), \
        float(jnp.max(jnp.abs(y - y_ref_f32)))

    # Tight check vs a reference using the same bf16 operands / f32 accumulation.
    y_ref_bf16 = jnp.einsum(
        "bsd,vd->bsv",
        x.astype(jnp.bfloat16), weight.astype(jnp.bfloat16),
        preferred_element_type=jnp.float32) + bias
    assert jnp.allclose(y, y_ref_bf16, atol=1e-3, rtol=1e-3), \
        float(jnp.max(jnp.abs(y - y_ref_bf16)))

    print("KERNEL_OK")
</pallas_src>

<mosaic_0001>
module attributes {stable_mosaic.version = 11 : i64} {
  func.func @_linear_kernel(%arg0: i32, %arg1: i32, %arg2: i32, %arg3: memref<16x128xbf16, #tpu.memory_space<vmem>>, %arg4: memref<128x128xbf16, #tpu.memory_space<vmem>>, %arg5: memref<1x128xf32, #tpu.memory_space<vmem>>, %arg6: memref<16x128xf32, #tpu.memory_space<vmem>>) attributes {dimension_semantics = [#tpu.dimension_semantics<parallel>, #tpu.dimension_semantics<parallel>, #tpu.dimension_semantics<arbitrary>], iteration_bounds = array<i64: 1, 1, 1>, scalar_prefetch = 0 : i64, scratch_operands = 0 : i64, tpu.core_type = #tpu.core_type<tc>, window_params = [{transform_indices = @transform_0, window_bounds = array<i64: 16, 128>}, {transform_indices = @transform_1, window_bounds = array<i64: 128, 128>}, {transform_indices = @transform_2, window_bounds = array<i64: 1, 128>}, {transform_indices = @transform_3, window_bounds = array<i64: 16, 128>}]} {
    %c0_i32 = arith.constant 0 : i32
    %0 = arith.cmpi eq, %arg2, %c0_i32 : i32
    %1 = arith.extui %0 : i1 to i32
    %c0_i32_0 = arith.constant 0 : i32
    %2 = arith.cmpi ne, %1, %c0_i32_0 : i32
    scf.if %2 {
      %c0_8 = arith.constant 0 : index
      %c0_9 = arith.constant 0 : index
      %9 = vector.load %arg5[%c0_8, %c0_9] : memref<1x128xf32, #tpu.memory_space<vmem>>, vector<1x128xf32>
      %10 = vector.shape_cast %9 : vector<1x128xf32> to vector<1x128xf32>
      %11 = vector.broadcast %10 : vector<1x128xf32> to vector<16x128xf32>
      %c0_10 = arith.constant 0 : index
      %c0_11 = arith.constant 0 : index
      %12 = vector.load %arg6[%c0_10, %c0_11] : memref<16x128xf32, #tpu.memory_space<vmem>>, vector<16x128xf32>
      tpu.vector_store %arg6[%c0_10, %c0_11], %11 {strides = array<i32>} : memref<16x128xf32, #tpu.memory_space<vmem>>, vector<16x128xf32>,
    } else {
    }
    %c0 = arith.constant 0 : index
    %c0_1 = arith.constant 0 : index
    %3 = vector.load %arg6[%c0, %c0_1] : memref<16x128xf32, #tpu.memory_space<vmem>>, vector<16x128xf32>
    %c0_2 = arith.constant 0 : index
    %c0_3 = arith.constant 0 : index
    %4 = vector.load %arg3[%c0_2, %c0_3] : memref<16x128xbf16, #tpu.memory_space<vmem>>, vector<16x128xbf16>
    %c0_4 = arith.constant 0 : index
    %c0_5 = arith.constant 0 : index
    %5 = vector.load %arg4[%c0_4, %c0_5] : memref<128x128xbf16, #tpu.memory_space<vmem>>, vector<128x128xbf16>
    %cst = arith.constant dense<0.000000e+00> : vector<16x128xf32>
    %6 = tpu.matmul %4, %5, %cst {dimension_numbers = #tpu.dot_dimension_numbers<[1], [0], [0], [1], [0, 0, 1, 1], [], []>} : vector<16x128xbf16>, vector<128x128xbf16>, vector<16x128xf32> -> vector<16x128xf32>
    %7 = arith.addf %3, %6 : vector<16x128xf32>
    %c0_6 = arith.constant 0 : index
    %c0_7 = arith.constant 0 : index
    %8 = vector.load %arg6[%c0_6, %c0_7] : memref<16x128xf32, #tpu.memory_space<vmem>>, vector<16x128xf32>
    tpu.vector_store %arg6[%c0_6, %c0_7], %7 {strides = array<i32>} : memref<16x128xf32, #tpu.memory_space<vmem>>, vector<16x128xf32>,
    return
  }
  func.func @transform_0(%arg0: i32, %arg1: i32, %arg2: i32) -> (i32, i32) {
    %c0_i32 = arith.constant 0 : i32
    return %arg0, %arg2 : i32, i32
  }
  func.func @transform_1(%arg0: i32, %arg1: i32, %arg2: i32) -> (i32, i32) {
    %c0_i32 = arith.constant 0 : i32
    return %arg2, %arg1 : i32, i32
  }
  func.func @transform_2(%arg0: i32, %arg1: i32, %arg2: i32) -> (i32, i32) {
    %c0_i32 = arith.constant 0 : i32
    %c0_i32_0 = arith.constant 0 : i32
    return %c0_i32, %arg1 : i32, i32
  }
  func.func @transform_3(%arg0: i32, %arg1: i32, %arg2: i32) -> (i32, i32) {
    %c0_i32 = arith.constant 0 : i32
    return %arg0, %arg1 : i32, i32
  }
}

</mosaic_0001>

<llo_original>
// kernel: linear_pallas.1
$region0: #{linear_pallas.1}
  #allocation0 [shape = 'u32[]', space=smem, size = 0x4, offset = 0x4, fixed_abs, tag = 'smem constant byte address 0x4 - core index']
  #allocation1 [shape = 'u32[144,128]{1,0:T(1,128)}', space=vmem, size = 0x12000, scoped, tag = 'internal scratch']
  %s0 = inlined_call_operand.vmem [shape: bf16[16,128], index: 0, kind: input, shape index: {}]
  %s1 = inlined_call_operand.hbm [shape: bf16[128,128], index: 1, kind: input, shape index: {}]
  %s2 = inlined_call_operand.vmem [shape: f32[1,128], index: 2, kind: input, shape index: {}]
  %s3 = inlined_call_operand.vmem [shape: f32[16,128], index: 3, kind: output, shape index: {}]
  %s4 = sld [smem:[#allocation0]]
  $region30: #{linear_pallas.1} parent=0
    _
  %s6 = ssub.s32 1, %s4
  %s7 = scalar_select 0, %s6, %s4
  $region1: #{linear_pallas.1} parent=0
    #allocation2 [shape = 'u8[32768]{0}', space=vmem, size = 0x8000, scoped, tag = 'input window, operand 1, single buffered']
    #allocation3 [shape = 's32[1]{0}', space=sflag, size = 0x4, scoped, tag = 'scoped memory for linear_pallas.1']
    %8 = vsyncpa [#allocation3], 0
    // Predicated region
    $region2: #{linear_pallas.1} parent=1 // pred_check
      _
    $region3: #{linear_pallas.1} parent=1 // pred_check_branch
      %10 = sbr.rel (0) target = $region5
    $region4: #{linear_pallas.1} parent=1 // pred_region
      _
    $region5: #{linear_pallas.1} parent=1 // pred_fallthru
      _
    // Predicated region
    $region6: #{linear_pallas.1} parent=1 // pred_check
      _
    $region7: #{linear_pallas.1} parent=1 // pred_check_branch
      %12 = sbr.rel (0) target = $region9
    $region8: #{linear_pallas.1} parent=1 // pred_region
      %s14 = ssub.s32 1024, 1024
      %15 = vsyncadd [#allocation3], %s14
      %s16 = sshll.u32 [#allocation2], 4
      %s17 = int_to_ptr.vmem [resolvable:$true] %s16
      %22 = dma.hbm_to_vmem [thread:$0]  %s1, 1024, %s17, [#allocation3], 64, 64, 4
    $region9: #{linear_pallas.1} parent=1 // pred_fallthru
      _
    // Predicated region
    $region10: #{linear_pallas.1} parent=1 // pred_check
      _
    $region11: #{linear_pallas.1} parent=1 // pred_check_branch
      %24 = sbr.rel (0) target = $region13
    $region12: #{linear_pallas.1} parent=1 // pred_region
      _
    $region13: #{linear_pallas.1} parent=1 // pred_fallthru
      _
    // Predicated region
    $region14: #{linear_pallas.1} parent=1 // pred_check
      _
    $region15: #{linear_pallas.1} parent=1 // pred_check_branch
      %26 = sbr.rel (0) target = $region17
    $region16: #{linear_pallas.1} parent=1 // pred_region
      %27 = dma.done [#allocation3], 1024
    $region17: #{linear_pallas.1} parent=1 // pred_fallthru
      _
    %p29 = scmp.eq.s32.totalorder 0, 0
    // Predicated region
    $region18: #{linear_pallas.1} parent=1 // pred_check
      %p30 = pneg %p29
    $region19: #{linear_pallas.1} parent=1 // pred_check_branch
      %32 = sbr.rel (%p30) target = $region21
    $region20: #{linear_pallas.1} parent=1 // pred_region
      %v33 = vld [vmem:[%s2] sm:$0x1]
      %v35 = vlaneseq
      %v36 = vshrl.u32 %v35, 7
      %v37 = vsub.s32 0, %v36
      %v38 = vrot.slane %v33, %v37
      %40 = vst [vmem:[%s3] sm:$0xff] %v38
      %41 = vst [vmem:[%s3 + $0x8] sm:$0xff] %v38
    $region21: #{linear_pallas.1} parent=1 // pred_fallthru
      _
    %v42 = vld [vmem:[%s3] sm:$0xff]
    %v43 = vld [vmem:[%s3 + $0x8] sm:$0xff]
    %v44 = vld [vmem:[%s0] sm:$0xf]
    %v45 = vld [vmem:[%s0 + $0x4] sm:$0xf]
    %v46 = vld [vmem:[#allocation2] sm:$0xf]
    %v47 = vld [vmem:[#allocation2 + $0x4] sm:$0xf]
    %v48 = vld [vmem:[#allocation2 + $0x8] sm:$0xf]
    %v49 = vld [vmem:[#allocation2 + $0xc] sm:$0xf]
    %v50 = vld [vmem:[#allocation2 + $0x10] sm:$0xf]
    %v51 = vld [vmem:[#allocation2 + $0x14] sm:$0xf]
    %v52 = vld [vmem:[#allocation2 + $0x18] sm:$0xf]
    %v53 = vld [vmem:[#allocation2 + $0x1c] sm:$0xf]
    %v54 = vld [vmem:[#allocation2 + $0x20] sm:$0xf]
    %v55 = vld [vmem:[#allocation2 + $0x24] sm:$0xf]
    %v56 = vld [vmem:[#allocation2 + $0x28] sm:$0xf]
    %v57 = vld [vmem:[#allocation2 + $0x2c] sm:$0xf]
    %v58 = vld [vmem:[#allocation2 + $0x30] sm:$0xf]
    %v59 = vld [vmem:[#allocation2 + $0x34] sm:$0xf]
    %v60 = vld [vmem:[#allocation2 + $0x38] sm:$0xf]
    %v61 = vld [vmem:[#allocation2 + $0x3c] sm:$0xf]
    %v64 = vunpack.c.l.b16 %v44
    %v65 = vunpack.c.l.b16 %v45
    %v66 = vpack.c.b16 %v65, %v64
    %v84 = vunpack.c.l.b16 %v46
    %v85 = vunpack.c.l.b16 %v47
    %v86 = vunpack.c.l.b16 %v48
    %v87 = vunpack.c.l.b16 %v49
    %v88 = vunpack.c.l.b16 %v50
    %v89 = vunpack.c.l.b16 %v51
    %v90 = vunpack.c.l.b16 %v52
    %v91 = vunpack.c.l.b16 %v53
    %v92 = vunpack.c.l.b16 %v54
    %v93 = vunpack.c.l.b16 %v55
    %v94 = vunpack.c.l.b16 %v56
    %v95 = vunpack.c.l.b16 %v57
    %v96 = vunpack.c.l.b16 %v58
    %v97 = vunpack.c.l.b16 %v59
    %v98 = vunpack.c.l.b16 %v60
    %v99 = vunpack.c.l.b16 %v61
    %v100 = vpack.c.b16 %v85, %v84
    %v101 = vpack.c.b16 %v87, %v86
    %v102 = vpack.c.b16 %v89, %v88
    %v103 = vpack.c.b16 %v91, %v90
    %v104 = vpack.c.b16 %v93, %v92
    %v105 = vpack.c.b16 %v95, %v94
    %v106 = vpack.c.b16 %v97, %v96
    %v107 = vpack.c.b16 %v99, %v98
    %116 = vmatprep.subr.bf16.mxu0 0
    %117 = vmatpush1.bf16.msra.mxu0 %v100
    %118 = vmatprep.subr.bf16.mxu0 0
    %119 = vmatpush1.bf16.msra.mxu0 %v101
    %120 = vmatprep.subr.bf16.mxu0 0
    %121 = vmatpush1.bf16.msra.mxu0 %v102
    %122 = vmatprep.subr.bf16.mxu0 0
    %123 = vmatpush1.bf16.msra.mxu0 %v103
    %124 = vmatprep.subr.bf16.mxu0 0
    %125 = vmatpush1.bf16.msra.mxu0 %v104
    %126 = vmatprep.subr.bf16.mxu0 0
    %127 = vmatpush1.bf16.msra.mxu0 %v105
    %128 = vmatprep.subr.bf16.mxu0 0
    %129 = vmatpush1.bf16.msra.mxu0 %v106
    %130 = vmatprep.subr.bf16.mxu0 0
    %131 = vmatpush1.bf16.msra.mxu0 %v107
    %132 = vmatprep.subr.bf16.mxu0 0
    %133 = vmatpush1.bf16.msra.mxu0 0
    %134 = vmatprep.subr.bf16.mxu0 0
    %135 = vmatpush1.bf16.msra.mxu0 0
    %136 = vmatprep.subr.bf16.mxu0 0
    %137 = vmatpush1.bf16.msra.mxu0 0
    %138 = vmatprep.subr.bf16.mxu0 0
    %139 = vmatpush1.bf16.msra.mxu0 0
    %140 = vmatprep.subr.bf16.mxu0 0
    %141 = vmatpush1.bf16.msra.mxu0 0
    %142 = vmatprep.subr.bf16.mxu0 0
    %143 = vmatpush1.bf16.msra.mxu0 0
    %144 = vmatprep.subr.bf16.mxu0 0
    %145 = vmatpush1.bf16.msra.mxu0 0
    %146 = vmatprep.subr.bf16.mxu0 0
    %147 = vmatpush1.bf16.msra.mxu0 0
    %148 = vmatprep.mubr.bf16.mxu0 0
    %149 = vmatmul.mubr.bf16.gmra.mrb[0].mxu0 %v66
    %v150 = vpop.f32.mrb[0].mxu0
    %v151 = vadd.f32 0.0, %v150
    %v152 = vpop.f32.mrb[0].mxu0
    %v153 = vpop.f32.mrb[0].mxu0
    %v154 = vadd.f32 0.0, %v153
    %v155 = vpop.f32.mrb[0].mxu0
    %156 = vdwg.mxu0
    %v157 = vadd.f32 %v42, %v151
    %v158 = vadd.f32 %v43, %v154
    %159 = vst [vmem:[%s3] sm:$0xff] %v157
    %160 = vst [vmem:[%s3 + $0x8] sm:$0xff] %v158
    // Predicated region
    $region22: #{linear_pallas.1} parent=1 // pred_check
      _
    $region23: #{linear_pallas.1} parent=1 // pred_check_branch
      %162 = sbr.rel (0) target = $region25
    $region24: #{linear_pallas.1} parent=1 // pred_region
      _
    $region25: #{linear_pallas.1} parent=1 // pred_fallthru
      _
    // Predicated region
    $region26: #{linear_pallas.1} parent=1 // pred_check
      _
    $region27: #{linear_pallas.1} parent=1 // pred_check_branch
      %164 = sbr.rel (0) target = $region29
    $region28: #{linear_pallas.1} parent=1 // pred_region
      _
    $region29: #{linear_pallas.1} parent=1 // pred_fallthru
      _
    %165 = vsyncpa [#allocation3], 1

</llo_original>
